<compile_context>
chip_gen: v6e
topology: v6e:2x2x1
jax: 0.10.0
libtpu: 0.0.40
codegen_flags: <defaults>
</compile_context>

<pallas_src>
import warnings

import numpy as np

import jax
import jax.numpy as jnp
from jax.experimental import pallas as pl
from jax.experimental.pallas import tpu as pltpu


# ----------------------------------------------------------------------------
# Host-side helpers: bilinear (align_corners=True) interpolation matrices.
# ----------------------------------------------------------------------------
def _interp_matrix_np(out_size, in_size):
    """Row-interpolation matrix matching torch bilinear align_corners=True."""
    scale = (in_size - 1) / (out_size - 1) if out_size > 1 else 0.0
    src = np.arange(out_size, dtype=np.float64) * scale
    i0 = np.clip(np.floor(src).astype(np.int64), 0, in_size - 1)
    i1 = np.clip(i0 + 1, 0, in_size - 1)
    w1 = (src - i0).astype(np.float32)
    w0 = (1.0 - w1).astype(np.float32)
    m = np.zeros((out_size, in_size), np.float32)
    rows = np.arange(out_size)
    np.add.at(m, (rows, i0), w0)
    np.add.at(m, (rows, i1), w1)
    return m


def _up_matrix_np(gh, gw, out_h, out_w):
    """(gh*gw, out_h*out_w) matrix U such that for a channel-major feature
    slab f (C, gh*gw), f @ U is the bilinearly upsampled (C, out_h*out_w)."""
    wh = _interp_matrix_np(out_h, gh)           # (out_h, gh)
    ww = _interp_matrix_np(out_w, gw)           # (out_w, gw)
    return np.ascontiguousarray(np.kron(wh, ww).T.astype(np.float32))


# ----------------------------------------------------------------------------
# Fused kernel: per image — patch-embed matmul + GELU + head matmul +
# bilinear-upsample matmul, output written channel-major and lane-dense.
# ----------------------------------------------------------------------------
def _fused_forward_kernel(x_ref, w1_ref, b1_ref, w2t_ref, b2_ref, up_ref,
                          out_ref):
    # x_ref:   (1, per_img, K)    bf16 patches of one image
    # w1_ref:  (K, hidden)        bf16
    # b1_ref:  (1, hidden)        f32
    # w2t_ref: (F, hidden)        f32 (head weights, pre-transposed on host)
    # b2_ref:  (F, 1)             f32
    # up_ref:  (per_img, Hd*Wd)   f32 (kron interp matrix, identity if no upsample)
    # out_ref: (1, F, Hd*Wd)      f32 NCHW feature map, spatial dims flattened
    x = x_ref[0]                                                   # (per_img, K)
    h = jnp.dot(x, w1_ref[...],
                preferred_element_type=jnp.float32)                # (per_img, hidden)
    h = jax.nn.gelu(h + b1_ref[...])                               # f32
    # Channel-major head features: f_t[c, m] = sum_h w2t[c, h] * h[m, h]
    # (contract the hidden/lane dim of both operands -> no explicit transpose).
    f_t = jax.lax.dot_general(
        w2t_ref[...], h,
        dimension_numbers=(((1,), (1,)), ((), ())),
        preferred_element_type=jnp.float32)                        # (F, per_img)
    f_t = f_t + b2_ref[...]
    # Fused bilinear upsample: one full-contraction, lane-dense matmul.
    out_ref[0] = jnp.dot(f_t, up_ref[...],
                         preferred_element_type=jnp.float32
                         ).astype(out_ref.dtype)


def _fused_forward(patches_bf16, w1_bf16, b1, w2t, b2, up, num_features):
    B, per_img, K = patches_bf16.shape
    hidden = w1_bf16.shape[1]
    F = num_features
    hwo = up.shape[1]
    out = pl.pallas_call(
        _fused_forward_kernel,
        out_shape=jax.ShapeDtypeStruct((B, F, hwo), jnp.float32),
        grid=(B,),
        in_specs=[
            pl.BlockSpec((1, per_img, K), lambda b: (b, 0, 0)),   # one image's patches
            pl.BlockSpec((K, hidden), lambda b: (0, 0)),          # weights stay resident
            pl.BlockSpec((1, hidden), lambda b: (0, 0)),
            pl.BlockSpec((F, hidden), lambda b: (0, 0)),
            pl.BlockSpec((F, 1), lambda b: (0, 0)),
            pl.BlockSpec((per_img, hwo), lambda b: (0, 0)),
        ],
        out_specs=pl.BlockSpec((1, F, hwo), lambda b: (b, 0, 0)),
        compiler_params=pltpu.CompilerParams(
            dimension_semantics=("parallel",)),
    )(patches_bf16, w1_bf16, b1, w2t, b2, up)
    return out                                                     # (B, F, Hd*Wd)


# ----------------------------------------------------------------------------
# API-parity helper: standalone bilinear upsample of an NCHW feature map.
# ----------------------------------------------------------------------------
def _interp_apply_kernel(f_ref, up_ref, o_ref):
    o_ref[0] = jnp.dot(f_ref[0], up_ref[...],
                       preferred_element_type=jnp.float32).astype(o_ref.dtype)


def upsample_feat_vec(feat, target_shape):
    """torch.nn.functional.interpolate(feat, target_shape, 'bilinear',
    align_corners=True) for an NCHW `feat`."""
    B, C, gh, gw = feat.shape
    Hd, Wd = int(target_shape[0]), int(target_shape[1])
    up = jnp.asarray(_up_matrix_np(gh, gw, Hd, Wd))                # (gh*gw, Hd*Wd)
    ff = feat.reshape(B, C, gh * gw)                               # free bitcast
    out = pl.pallas_call(
        _interp_apply_kernel,
        out_shape=jax.ShapeDtypeStruct((B, C, Hd * Wd), jnp.float32),
        grid=(B,),
        in_specs=[
            pl.BlockSpec((1, C, gh * gw), lambda b: (b, 0, 0)),
            pl.BlockSpec((gh * gw, Hd * Wd), lambda b: (0, 0)),
        ],
        out_specs=pl.BlockSpec((1, C, Hd * Wd), lambda b: (b, 0, 0)),
        compiler_params=pltpu.CompilerParams(
            dimension_semantics=("parallel",)),
    )(ff, up)
    return out.reshape(B, C, Hd, Wd)                               # free bitcast


# ----------------------------------------------------------------------------
# Module wrapper
# ----------------------------------------------------------------------------
class LSegFeatureExtractor:
    def __init__(self, key, in_ch=3, patch=8, hidden=32, num_features=16,
                 upsample=False, **kwargs):
        self.patch = patch
        self.in_ch = in_ch
        self.hidden = hidden
        self.num_features = num_features

        k1, k2, k3, k4 = jax.random.split(key, 4)
        K = in_ch * patch * patch
        # deterministic synthetic parameters (the real ckpt is not available)
        self.w1 = (jax.random.normal(k1, (K, hidden), jnp.float32)
                   * (1.0 / jnp.sqrt(K)))
        self.w1_bf = self.w1.astype(jnp.bfloat16)
        self.b1 = jax.random.normal(k2, (1, hidden), jnp.float32) * 0.01
        # head weights stored pre-transposed (F, hidden); bias as (F, 1)
        self.w2t = (jax.random.normal(k3, (num_features, hidden), jnp.float32)
                    * (1.0 / jnp.sqrt(hidden)))
        self.b2 = jax.random.normal(k4, (num_features, 1), jnp.float32) * 0.01

        self.upsample = False
        if upsample:
            if 'desired_height' in kwargs:
                if 'desired_width' in kwargs:
                    self.desired_height = int(kwargs['desired_height'])
                    self.desired_width = int(kwargs['desired_width'])
                    self.upsample = True
                else:
                    warnings.warn('Ignoring upsample arguments as they are '
                                  'incomplete. Missing `desired_width`.')
            else:
                warnings.warn('Ignoring upsample arguments as they are '
                              'incomplete. Missing `desired_height`.')
        self._up_cache = {}

    # ------------------------------------------------------------------ #
    def _up_matrix(self, gh, gw):
        """Interpolation (or identity) matrix, built once on host and cached."""
        if self.upsample:
            Hd, Wd = self.desired_height, self.desired_width
        else:
            Hd, Wd = gh, gw
        key = (gh, gw, Hd, Wd, self.upsample)
        m = self._up_cache.get(key)
        if m is None:
            if self.upsample:
                m_np = _up_matrix_np(gh, gw, Hd, Wd)
            else:
                m_np = np.eye(gh * gw, dtype=np.float32)
            m = jnp.asarray(m_np)
            self._up_cache[key] = m
        return m, Hd, Wd

    def forward(self, img):
        B, C, H, W = img.shape
        assert C == self.in_ch, (C, self.in_ch)
        p = self.patch
        assert H % p == 0 and W % p == 0, (H, W, p)
        gh, gw = H // p, W // p
        per_img = gh * gw
        K = C * p * p
        # im2col in XLA (small pre-pass), cast to bf16 so the dominant HBM
        # read into the kernel is half-width.
        patches = (img.reshape(B, C, gh, p, gw, p)
                      .transpose(0, 2, 4, 1, 3, 5)
                      .reshape(B, per_img, K)
                      .astype(jnp.bfloat16))
        up, Hd, Wd = self._up_matrix(gh, gw)
        out_flat = _fused_forward(patches, self.w1_bf, self.b1,
                                  self.w2t, self.b2, up,
                                  self.num_features)               # (B, F, Hd*Wd)
        return out_flat.reshape(B, self.num_features, Hd, Wd)      # free bitcast

    __call__ = forward


# ----------------------------------------------------------------------------
# Pure-JAX reference (same math, f32, bf16-quantized inputs) for correctness.
# ----------------------------------------------------------------------------
def _reference_forward(img, model):
    B, C, H, W = img.shape
    p = model.patch
    gh, gw = H // p, W // p
    patches = (img.reshape(B, C, gh, p, gw, p)
                  .transpose(0, 2, 4, 1, 3, 5)
                  .reshape(B * gh * gw, C * p * p))
    xq = patches.astype(jnp.bfloat16).astype(jnp.float32)
    w1q = model.w1_bf.astype(jnp.float32)
    h = jax.nn.gelu(xq @ w1q + model.b1)
    f = h @ model.w2t.T + model.b2.T
    feat = f.reshape(B, gh, gw, model.num_features).transpose(0, 3, 1, 2)
    if model.upsample:
        wh = jnp.asarray(_interp_matrix_np(model.desired_height, gh))
        ww = jnp.asarray(_interp_matrix_np(model.desired_width, gw))
        feat = jnp.einsum('ij,bcjk,lk->bcil', wh, feat, ww)
    return feat


if __name__ == "__main__":
    key = jax.random.PRNGKey(0)
    k_img, k_param = jax.random.split(key)

    B, Cin, H, W = 2, 3, 32, 32
    img = jax.random.normal(k_img, (B, Cin, H, W), jnp.float32)

    # --- upsample path -------------------------------------------------- #
    ext_up = LSegFeatureExtractor(
        k_param, in_ch=Cin, patch=8, hidden=32, num_features=16,
        upsample=True, desired_height=16, desired_width=16)
    feat_up = jax.block_until_ready(ext_up(img))
    ref_up = _reference_forward(img, ext_up)
    assert feat_up.shape == (B, 16, 16, 16), feat_up.shape
    err_up = float(jnp.max(jnp.abs(feat_up - ref_up)))
    assert jnp.allclose(feat_up, ref_up, atol=5e-3, rtol=5e-3), err_up

    # --- no-upsample path (identity interp matrix, NCHW straight out) --- #
    ext_nu = LSegFeatureExtractor(
        k_param, in_ch=Cin, patch=8, hidden=32, num_features=16,
        upsample=False)
    feat_nu = jax.block_until_ready(ext_nu(img))
    ref_nu = _reference_forward(img, ext_nu)
    assert feat_nu.shape == (B, 16, 4, 4), feat_nu.shape
    err_nu = float(jnp.max(jnp.abs(feat_nu - ref_nu)))
    assert jnp.allclose(feat_nu, ref_nu, atol=5e-3, rtol=5e-3), err_nu

    # --- standalone upsample helper (API parity with upsample_feat_vec) - #
    up2 = jax.block_until_ready(upsample_feat_vec(feat_nu, [16, 16]))
    wh = jnp.asarray(_interp_matrix_np(16, 4))
    ww = jnp.asarray(_interp_matrix_np(16, 4))
    ref_up2 = jnp.einsum('ij,bcjk,lk->bcil', wh, feat_nu, ww)
    err2 = float(jnp.max(jnp.abs(up2 - ref_up2)))
    assert jnp.allclose(up2, ref_up2, atol=5e-3, rtol=5e-3), err2

    print("KERNEL_OK")
</pallas_src>

<mosaic_0001>
module attributes {stable_mosaic.version = 11 : i64} {
  func.func @_fused_forward_kernel(%arg0: i32, %arg1: memref<1x16x192xbf16, #tpu.memory_space<vmem>>, %arg2: memref<192x32xbf16, #tpu.memory_space<vmem>>, %arg3: memref<1x32xf32, #tpu.memory_space<vmem>>, %arg4: memref<16x32xf32, #tpu.memory_space<vmem>>, %arg5: memref<16x1xf32, #tpu.memory_space<vmem>>, %arg6: memref<16x256xf32, #tpu.memory_space<vmem>>, %arg7: memref<1x16x256xf32, #tpu.memory_space<vmem>>) attributes {dimension_semantics = [#tpu.dimension_semantics<parallel>], iteration_bounds = array<i64: 2>, scalar_prefetch = 0 : i64, scratch_operands = 0 : i64, tpu.core_type = #tpu.core_type<tc>, window_params = [{transform_indices = @transform_0, window_bounds = array<i64: 1, 16, 192>}, {pipeline_mode = #tpu.pipeline_mode<synchronous>, transform_indices = @transform_1, window_bounds = array<i64: 192, 32>}, {pipeline_mode = #tpu.pipeline_mode<synchronous>, transform_indices = @transform_2, window_bounds = array<i64: 1, 32>}, {pipeline_mode = #tpu.pipeline_mode<synchronous>, transform_indices = @transform_3, window_bounds = array<i64: 16, 32>}, {pipeline_mode = #tpu.pipeline_mode<synchronous>, transform_indices = @transform_4, window_bounds = array<i64: 16, 1>}, {pipeline_mode = #tpu.pipeline_mode<synchronous>, transform_indices = @transform_5, window_bounds = array<i64: 16, 256>}, {transform_indices = @transform_6, window_bounds = array<i64: 1, 16, 256>}]} {
    %c0 = arith.constant 0 : index
    %c0_0 = arith.constant 0 : index
    %c0_1 = arith.constant 0 : index
    %0 = vector.load %arg1[%c0, %c0_0, %c0_1] : memref<1x16x192xbf16, #tpu.memory_space<vmem>>, vector<1x16x192xbf16>
    %1 = vector.shape_cast %0 : vector<1x16x192xbf16> to vector<16x192xbf16>
    %c0_2 = arith.constant 0 : index
    %c0_3 = arith.constant 0 : index
    %2 = vector.load %arg2[%c0_2, %c0_3] : memref<192x32xbf16, #tpu.memory_space<vmem>>, vector<192x32xbf16>
    %cst = arith.constant dense<0.000000e+00> : vector<16x32xf32>
    %3 = tpu.matmul %1, %2, %cst {dimension_numbers = #tpu.dot_dimension_numbers<[1], [0], [0], [1], [0, 0, 1, 1], [], []>} : vector<16x192xbf16>, vector<192x32xbf16>, vector<16x32xf32> -> vector<16x32xf32>
    %c0_4 = arith.constant 0 : index
    %c0_5 = arith.constant 0 : index
    %4 = vector.load %arg3[%c0_4, %c0_5] : memref<1x32xf32, #tpu.memory_space<vmem>>, vector<1x32xf32>
    %5 = vector.broadcast %4 : vector<1x32xf32> to vector<16x32xf32>
    %6 = arith.addf %3, %5 : vector<16x32xf32>
    %7 = arith.mulf %6, %6 : vector<16x32xf32>
    %8 = arith.mulf %6, %7 : vector<16x32xf32>
    %cst_6 = arith.constant 4.471500e-02 : f32
    %9 = vector.broadcast %cst_6 : f32 to vector<16x32xf32>
    %10 = arith.mulf %9, %8 : vector<16x32xf32>
    %11 = arith.addf %6, %10 : vector<16x32xf32>
    %cst_7 = arith.constant 0.797884583 : f32
    %12 = vector.broadcast %cst_7 : f32 to vector<16x32xf32>
    %13 = arith.mulf %12, %11 : vector<16x32xf32>
    %14 = math.tanh %13 : vector<16x32xf32>
    %cst_8 = arith.constant 1.000000e+00 : f32
    %15 = vector.broadcast %cst_8 : f32 to vector<16x32xf32>
    %16 = arith.addf %15, %14 : vector<16x32xf32>
    %cst_9 = arith.constant 5.000000e-01 : f32
    %17 = vector.broadcast %cst_9 : f32 to vector<16x32xf32>
    %18 = arith.mulf %17, %16 : vector<16x32xf32>
    %19 = arith.mulf %6, %18 : vector<16x32xf32>
    %c0_10 = arith.constant 0 : index
    %c0_11 = arith.constant 0 : index
    %20 = vector.load %arg4[%c0_10, %c0_11] : memref<16x32xf32, #tpu.memory_space<vmem>>, vector<16x32xf32>
    %cst_12 = arith.constant dense<0.000000e+00> : vector<16x16xf32>
    %21 = tpu.matmul %20, %19, %cst_12 {dimension_numbers = #tpu.dot_dimension_numbers<[1], [1], [0], [0], [0, 0, 1, 0], [], []>} : vector<16x32xf32>, vector<16x32xf32>, vector<16x16xf32> -> vector<16x16xf32>
    %c0_13 = arith.constant 0 : index
    %c0_14 = arith.constant 0 : index
    %22 = vector.load %arg5[%c0_13, %c0_14] : memref<16x1xf32, #tpu.memory_space<vmem>>, vector<16x1xf32>
    %23 = vector.broadcast %22 : vector<16x1xf32> to vector<16x16xf32>
    %24 = arith.addf %21, %23 : vector<16x16xf32>
    %c0_15 = arith.constant 0 : index
    %c0_16 = arith.constant 0 : index
    %25 = vector.load %arg6[%c0_15, %c0_16] : memref<16x256xf32, #tpu.memory_space<vmem>>, vector<16x256xf32>
    %cst_17 = arith.constant dense<0.000000e+00> : vector<16x256xf32>
    %26 = tpu.matmul %24, %25, %cst_17 {dimension_numbers = #tpu.dot_dimension_numbers<[1], [0], [0], [1], [0, 0, 1, 1], [], []>} : vector<16x16xf32>, vector<16x256xf32>, vector<16x256xf32> -> vector<16x256xf32>
    %c0_18 = arith.constant 0 : index
    %c0_19 = arith.constant 0 : index
    %c0_20 = arith.constant 0 : index
    %27 = vector.load %arg7[%c0_18, %c0_19, %c0_20] : memref<1x16x256xf32, #tpu.memory_space<vmem>>, vector<1x16x256xf32>
    %28 = vector.shape_cast %27 : vector<1x16x256xf32> to vector<16x256xf32>
    %29 = vector.shape_cast %26 : vector<16x256xf32> to vector<1x16x256xf32>
    tpu.vector_store %arg7[%c0_18, %c0_19, %c0_20], %29 {strides = array<i32>} : memref<1x16x256xf32, #tpu.memory_space<vmem>>, vector<1x16x256xf32>,
    return
  }
  func.func @transform_0(%arg0: i32) -> (i32, i32, i32) {
    %c0_i32 = arith.constant 0 : i32
    %c0_i32_0 = arith.constant 0 : i32
    %c0_i32_1 = arith.constant 0 : i32
    return %arg0, %c0_i32, %c0_i32_0 : i32, i32, i32
  }
  func.func @transform_1(%arg0: i32) -> (i32, i32) {
    %c0_i32 = arith.constant 0 : i32
    %c0_i32_0 = arith.constant 0 : i32
    %c0_i32_1 = arith.constant 0 : i32
    return %c0_i32, %c0_i32_0 : i32, i32
  }
  func.func @transform_2(%arg0: i32) -> (i32, i32) {
    %c0_i32 = arith.constant 0 : i32
    %c0_i32_0 = arith.constant 0 : i32
    %c0_i32_1 = arith.constant 0 : i32
    return %c0_i32, %c0_i32_0 : i32, i32
  }
  func.func @transform_3(%arg0: i32) -> (i32, i32) {
    %c0_i32 = arith.constant 0 : i32
    %c0_i32_0 = arith.constant 0 : i32
    %c0_i32_1 = arith.constant 0 : i32
    return %c0_i32, %c0_i32_0 : i32, i32
  }
  func.func @transform_4(%arg0: i32) -> (i32, i32) {
    %c0_i32 = arith.constant 0 : i32
    %c0_i32_0 = arith.constant 0 : i32
    %c0_i32_1 = arith.constant 0 : i32
    return %c0_i32, %c0_i32_0 : i32, i32
  }
  func.func @transform_5(%arg0: i32) -> (i32, i32) {
    %c0_i32 = arith.constant 0 : i32
    %c0_i32_0 = arith.constant 0 : i32
    %c0_i32_1 = arith.constant 0 : i32
    return %c0_i32, %c0_i32_0 : i32, i32
  }
  func.func @transform_6(%arg0: i32) -> (i32, i32, i32) {
    %c0_i32 = arith.constant 0 : i32
    %c0_i32_0 = arith.constant 0 : i32
    %c0_i32_1 = arith.constant 0 : i32
    return %arg0, %c0_i32, %c0_i32_0 : i32, i32, i32
  }
}

</mosaic_0001>

<llo_original>
// kernel: tpu_custom_call.1
$region0: #{tpu_custom_call.1}
  #allocation0 [shape = 'u32[]', space=smem, size = 0x4, offset = 0x4, fixed_abs, tag = 'smem constant byte address 0x4 - core index']
  #allocation1 [shape = 'u32[144,128]{1,0:T(1,128)}', space=vmem, size = 0x12000, scoped, tag = 'internal scratch']
  %s0 = inlined_call_operand.vmem [shape: bf16[2,16,192], index: 0, kind: input, shape index: {}]
  %s1 = inlined_call_operand.vmem [shape: bf16[192,32], index: 1, kind: input, shape index: {}]
  %s2 = inlined_call_operand.vmem [shape: f32[1,32], index: 2, kind: input, shape index: {}]
  %s3 = inlined_call_operand.vmem [shape: f32[16,32], index: 3, kind: input, shape index: {}]
  %s4 = inlined_call_operand.vmem [shape: f32[16,1], index: 4, kind: input, shape index: {}]
  %s5 = inlined_call_operand.vmem [shape: f32[16,256], index: 5, kind: input, shape index: {}]
  %s6 = inlined_call_operand.hbm [shape: f32[2,16,256], index: 6, kind: output, shape index: {}]
  %s7 = sld [smem:[#allocation0]]
  $region57: #{tpu_custom_call.1} parent=0
    _
  %s9 = ssub.s32 1, %s7
  %s10 = scalar_select 0, %s9, %s7
  $region1: #{tpu_custom_call.1} parent=0
    #allocation2 [shape = 'u8[32768]{0}', space=vmem, size = 0x8000, scoped, tag = 'output window, operand 0']
    #allocation3 [shape = 's32[2]{0}', space=sflag, size = 0x8, scoped, tag = 'scoped memory for tpu_custom_call.1']
    %11 = vsyncpa [#allocation3], 0
    %s12 = scalar_lea.sflag [#allocation3], 1
    %13 = vsyncpa %s12, 0
    loop: start=0, step=1, limit=4
    $region2: #{tpu_custom_call.1} parent=1 // loop_pre_header
      _
    $region3: #{tpu_custom_call.1} parent=1 // loop_header
      %s15 = sphi 0, %s19
      %p16 = scmp.ge.s32.totalorder %s15, 4
      %s25 = sphi 0, %s27
      %s28 = sphi 0, %s25
      %s29 = sphi 0, %s28
      %s45 = sphi 0, %s29
      %s49 = sphi 0, %s49
      %s51 = sphi 0, %s49
      %s52 = sphi 0, %s51
      %s66 = sphi 0, %s52
      %s70 = sphi 0, %s70
      %s72 = sphi 0, %s70
      %s73 = sphi 0, %s72
      %s87 = sphi 0, %s73
      %s91 = sphi 0, %s91
      %s93 = sphi 0, %s91
      %s94 = sphi 0, %s93
      %s108 = sphi 0, %s94
      %s112 = sphi 0, %s112
      %s114 = sphi 0, %s112
      %s115 = sphi 0, %s114
      %s129 = sphi 0, %s115
      %s133 = sphi 0, %s133
      %s135 = sphi 0, %s133
      %s136 = sphi 0, %s135
      %s150 = sphi 0, %s136
      %s156 = sphi 0, %s158
      %s159 = sphi 0, %s156
      %s160 = sphi 0, %s159
      %s176 = sphi 0, %s160
    $region4: #{tpu_custom_call.1} parent=1 // loop_header_branch
      %18 = sbr.rel (%p16) target = $region8
    $region5: #{tpu_custom_call.1} parent=1 // loop_body
      %s20 = ssub.s32 %s15, 1
      %s21 = ssub.s32 %s15, 2
      %s22 = sadd.s32 %s15, 1
      %s23 = ssub.s32 %s15, %s22
      %p24 = scmp.eq.s32.totalorder %s23, 0
      %s26 = sadd.s32 %s25, 1
      %s27 = scalar_select %p24, %s25, %s26
      %p30 = pneg %p24
      %p31 = scmp.eq.s32.totalorder %s15, 1
      %p32 = por %p30, %p31
      %p33 = scmp.ne.s32.totalorder %s25, %s28
      %p34 = scmp.eq.s32.totalorder %s15, 0
      %p35 = por %p33, %p34
      %p36 = scmp.ne.s32.totalorder %s25, %s28
      %p37 = scmp.eq.s32.totalorder %s20, 1
      %p38 = por %p36, %p37
      %p39 = scmp.ne.s32.totalorder %s28, %s29
      %p40 = scmp.eq.s32.totalorder %s20, 0
      %p41 = por %p39, %p40
      %p42 = scmp.ne.s32.totalorder %s28, %s29
      %p43 = scmp.eq.s32.totalorder %s21, 1
      %p44 = por %p42, %p43
      %p46 = scmp.ne.s32.totalorder %s29, %s45
      %p47 = scmp.eq.s32.totalorder %s21, 0
      %p48 = por %p46, %p47
      %s50 = sadd.s32 %s49, 1
      %p53 = scmp.eq.s32.totalorder %s15, 1
      %p54 = scmp.ne.s32.totalorder %s49, %s51
      %p55 = scmp.eq.s32.totalorder %s15, 0
      %p56 = por %p54, %p55
      %p57 = scmp.ne.s32.totalorder %s49, %s51
      %p58 = scmp.eq.s32.totalorder %s20, 1
      %p59 = por %p57, %p58
      %p60 = scmp.ne.s32.totalorder %s51, %s52
      %p61 = scmp.eq.s32.totalorder %s20, 0
      %p62 = por %p60, %p61
      %p63 = scmp.ne.s32.totalorder %s51, %s52
      %p64 = scmp.eq.s32.totalorder %s21, 1
      %p65 = por %p63, %p64
      %p67 = scmp.ne.s32.totalorder %s52, %s66
      %p68 = scmp.eq.s32.totalorder %s21, 0
      %p69 = por %p67, %p68
      %s71 = sadd.s32 %s70, 1
      %p74 = scmp.eq.s32.totalorder %s15, 1
      %p75 = scmp.ne.s32.totalorder %s70, %s72
      %p76 = scmp.eq.s32.totalorder %s15, 0
      %p77 = por %p75, %p76
      %p78 = scmp.ne.s32.totalorder %s70, %s72
      %p79 = scmp.eq.s32.totalorder %s20, 1
      %p80 = por %p78, %p79
      %p81 = scmp.ne.s32.totalorder %s72, %s73
      %p82 = scmp.eq.s32.totalorder %s20, 0
      %p83 = por %p81, %p82
      %p84 = scmp.ne.s32.totalorder %s72, %s73
      %p85 = scmp.eq.s32.totalorder %s21, 1
      %p86 = por %p84, %p85
      %p88 = scmp.ne.s32.totalorder %s73, %s87
      %p89 = scmp.eq.s32.totalorder %s21, 0
      %p90 = por %p88, %p89
      %s92 = sadd.s32 %s91, 1
      %p95 = scmp.eq.s32.totalorder %s15, 1
      %p96 = scmp.ne.s32.totalorder %s91, %s93
      %p97 = scmp.eq.s32.totalorder %s15, 0
      %p98 = por %p96, %p97
      %p99 = scmp.ne.s32.totalorder %s91, %s93
      %p100 = scmp.eq.s32.totalorder %s20, 1
      %p101 = por %p99, %p100
      %p102 = scmp.ne.s32.totalorder %s93, %s94
      %p103 = scmp.eq.s32.totalorder %s20, 0
      %p104 = por %p102, %p103
      %p105 = scmp.ne.s32.totalorder %s93, %s94
      %p106 = scmp.eq.s32.totalorder %s21, 1
      %p107 = por %p105, %p106
      %p109 = scmp.ne.s32.totalorder %s94, %s108
      %p110 = scmp.eq.s32.totalorder %s21, 0
      %p111 = por %p109, %p110
      %s113 = sadd.s32 %s112, 1
      %p116 = scmp.eq.s32.totalorder %s15, 1
      %p117 = scmp.ne.s32.totalorder %s112, %s114
      %p118 = scmp.eq.s32.totalorder %s15, 0
      %p119 = por %p117, %p118
      %p120 = scmp.ne.s32.totalorder %s112, %s114
      %p121 = scmp.eq.s32.totalorder %s20, 1
      %p122 = por %p120, %p121
      %p123 = scmp.ne.s32.totalorder %s114, %s115
      %p124 = scmp.eq.s32.totalorder %s20, 0
      %p125 = por %p123, %p124
      %p126 = scmp.ne.s32.totalorder %s114, %s115
      %p127 = scmp.eq.s32.totalorder %s21, 1
      %p128 = por %p126, %p127
      %p130 = scmp.ne.s32.totalorder %s115, %s129
      %p131 = scmp.eq.s32.totalorder %s21, 0
      %p132 = por %p130, %p131
      %s134 = sadd.s32 %s133, 1
      %p137 = scmp.eq.s32.totalorder %s15, 1
      %p138 = scmp.ne.s32.totalorder %s133, %s135
      %p139 = scmp.eq.s32.totalorder %s15, 0
      %p140 = por %p138, %p139
      %p141 = scmp.ne.s32.totalorder %s133, %s135
      %p142 = scmp.eq.s32.totalorder %s20, 1
      %p143 = por %p141, %p142
      %p144 = scmp.ne.s32.totalorder %s135, %s136
      %p145 = scmp.eq.s32.totalorder %s20, 0
      %p146 = por %p144, %p145
      %p147 = scmp.ne.s32.totalorder %s135, %s136
      %p148 = scmp.eq.s32.totalorder %s21, 1
      %p149 = por %p147, %p148
      %p151 = scmp.ne.s32.totalorder %s136, %s150
      %p152 = scmp.eq.s32.totalorder %s21, 0
      %p153 = por %p151, %p152
      %s154 = ssub.s32 %s15, %s22
      %p155 = scmp.eq.s32.totalorder %s154, 0
      %s157 = sadd.s32 %s156, 1
      %s158 = scalar_select %p155, %s156, %s157
      %p161 = pneg %p155
      %p162 = scmp.eq.s32.totalorder %s15, 1
      %p163 = por %p161, %p162
      %p164 = scmp.ne.s32.totalorder %s156, %s159
      %p165 = scmp.eq.s32.totalorder %s15, 0
      %p166 = por %p164, %p165
      %p167 = scmp.ne.s32.totalorder %s156, %s159
      %p168 = scmp.eq.s32.totalorder %s20, 1
      %p169 = por %p167, %p168
      %p170 = scmp.ne.s32.totalorder %s159, %s160
      %p171 = scmp.eq.s32.totalorder %s20, 0
      %p172 = por %p170, %p171
      %p173 = scmp.ne.s32.totalorder %s159, %s160
      %p174 = scmp.eq.s32.totalorder %s21, 1
      %p175 = por %p173, %p174
      %p177 = scmp.ne.s32.totalorder %s160, %s176
      %p178 = scmp.eq.s32.totalorder %s21, 0
      %p179 = por %p177, %p178
      %p180 = scmp.le.s32.totalorder 1, %s15
      %p181 = scmp.lt.s32.totalorder %s15, 3
      %p182 = pnand %p180, %p181
      %p183 = pneg %p182
      // Predicated region
      $region9: #{tpu_custom_call.1} parent=5 // pred_check
        _
      $region10: #{tpu_custom_call.1} parent=5 // pred_check_branch
        %185 = sbr.rel (%p182) target = $region12
      $region11: #{tpu_custom_call.1} parent=5 // pred_region
        %s186 = ssub.s32 %s15, 1
        // Predicated region
        $region13: #{tpu_custom_call.1} parent=11 // pred_check
          %p187 = pneg %p62
        $region14: #{tpu_custom_call.1} parent=11 // pred_check_branch
          %189 = sbr.rel (%p187) target = $region16
        $region15: #{tpu_custom_call.1} parent=11 // pred_region
          _
        $region16: #{tpu_custom_call.1} parent=11 // pred_fallthru
          _
        // Predicated region
        $region17: #{tpu_custom_call.1} parent=11 // pred_check
          %p190 = pneg %p83
        $region18: #{tpu_custom_call.1} parent=11 // pred_check_branch
          %192 = sbr.rel (%p190) target = $region20
        $region19: #{tpu_custom_call.1} parent=11 // pred_region
          _
        $region20: #{tpu_custom_call.1} parent=11 // pred_fallthru
          _
        // Predicated region
        $region21: #{tpu_custom_call.1} parent=11 // pred_check
          %p193 = pneg %p104
        $region22: #{tpu_custom_call.1} parent=11 // pred_check_branch
          %195 = sbr.rel (%p193) target = $region24
        $region23: #{tpu_custom_call.1} parent=11 // pred_region
          _
        $region24: #{tpu_custom_call.1} parent=11 // pred_fallthru
          _
        // Predicated region
        $region25: #{tpu_custom_call.1} parent=11 // pred_check
          %p196 = pneg %p125
        $region26: #{tpu_custom_call.1} parent=11 // pred_check_branch
          %198 = sbr.rel (%p196) target = $region28
        $region27: #{tpu_custom_call.1} parent=11 // pred_region
          _
        $region28: #{tpu_custom_call.1} parent=11 // pred_fallthru
          _
        // Predicated region
        $region29: #{tpu_custom_call.1} parent=11 // pred_check
          %p199 = pneg %p146
        $region30: #{tpu_custom_call.1} parent=11 // pred_check_branch
          %201 = sbr.rel (%p199) target = $region32
        $region31: #{tpu_custom_call.1} parent=11 // pred_region
          _
        $region32: #{tpu_custom_call.1} parent=11 // pred_fallthru
          _
      $region12: #{tpu_custom_call.1} parent=5 // pred_fallthru
        _
      %p202 = scmp.lt.s32.totalorder %s15, 2
      // Predicated region
      $region33: #{tpu_custom_call.1} parent=5 // pred_check
        %p203 = pneg %p202
      $region34: #{tpu_custom_call.1} parent=5 // pred_check_branch
        %205 = sbr.rel (%p203) target = $region36
      $region35: #{tpu_custom_call.1} parent=5 // pred_region
        // Predicated region
        $region37: #{tpu_custom_call.1} parent=35 // pred_check
          %p206 = pneg %p35
        $region38: #{tpu_custom_call.1} parent=35 // pred_check_branch
          %208 = sbr.rel (%p206) target = $region40
        $region39: #{tpu_custom_call.1} parent=35 // pred_region
          %p209 = scmp.lt.s32.totalorder %s15, 1
          %s210 = scalar_select %p209, %s15, 1
          %s211 = smul.addr %s210, 4
          %s212 = smul.addr %s211, 4
          %s213 = scalar_lea.vmem %s0, %s212
        $region40: #{tpu_custom_call.1} parent=35 // pred_fallthru
          _
      $region36: #{tpu_custom_call.1} parent=5 // pred_fallthru
        _
      %p214 = scmp.le.s32.totalorder 1, %s15
      %p215 = scmp.lt.s32.totalorder %s15, 3
      %p216 = pnand %p214, %p215
      %p217 = pneg %p216
      // Predicated region
      $region41: #{tpu_custom_call.1} parent=5 // pred_check
        _
      $region42: #{tpu_custom_call.1} parent=5 // pred_check_branch
        %219 = sbr.rel (%p216) target = $region44
      $region43: #{tpu_custom_call.1} parent=5 // pred_region
        %s220 = ssub.s32 %s15, 1
        %p221 = scmp.lt.s32.totalorder %s20, 1
        %s222 = scalar_select %p221, %s20, 1
        %s223 = smul.addr %s222, 4
        %s224 = smul.addr %s223, 4
        %s225 = scalar_lea.vmem %s0, %s224
        %p226 = pneg %p41
        %p227 = pneg %p38
        %p228 = pneg %p62
        %p229 = pneg %p59
        %p230 = pneg %p83
        %p231 = pneg %p80
        %p232 = pneg %p104
        %p233 = pneg %p101
        %p234 = pneg %p125
        %p235 = pneg %p122
        %p236 = pneg %p146
        %p237 = pneg %p143
        %p238 = pneg %p172
        %p239 = pneg %p169
        %s240 = sand.u32 %s159, 1
        %s241 = scalar_lea.sflag [#allocation3], %s240
        %s242 = sand.u32 %s159, 1
        %s243 = smul.addr %s242, 32
        %s244 = scalar_lea.vmem [#allocation2], %s243
        %p245 = scmp.lt.s32.totalorder %s20, 1
        %s246 = scalar_select %p245, %s20, 1
        %s247 = smul.addr %s246, 4
        %s248 = smul.addr %s247, 4
        %s249 = scalar_lea.vmem %s0, %s248
        %v251 = vld [vmem:[%s249] sm:$0xff]
        %v252 = vld [vmem:[%s249 + $0x8] sm:$0xff]
        %v253 = vld [vmem:[%s1] sm:$0xf]
        %v254 = vld [vmem:[%s1 + $0x4] sm:$0xf]
        %v255 = vld [vmem:[%s1 + $0x8] sm:$0xf]
        %v256 = vld [vmem:[%s1 + $0xc] sm:$0xf]
        %v257 = vld [vmem:[%s1 + $0x10] sm:$0xf]
        %v258 = vld [vmem:[%s1 + $0x14] sm:$0xf]
        %v259 = vld [vmem:[%s1 + $0x18] sm:$0xf]
        %v260 = vld [vmem:[%s1 + $0x1c] sm:$0xf]
        %v261 = vld [vmem:[%s1 + $0x20] sm:$0xf]
        %v262 = vld [vmem:[%s1 + $0x24] sm:$0xf]
        %v263 = vld [vmem:[%s1 + $0x28] sm:$0xf]
        %v264 = vld [vmem:[%s1 + $0x2c] sm:$0xf]
        %v265 = vld [vmem:[%s1 + $0x30] sm:$0xf]
        %v266 = vld [vmem:[%s1 + $0x34] sm:$0xf]
        %v267 = vld [vmem:[%s1 + $0x38] sm:$0xf]
        %v268 = vld [vmem:[%s1 + $0x3c] sm:$0xf]
        %v269 = vld [vmem:[%s1 + $0x40] sm:$0xf]
        %v270 = vld [vmem:[%s1 + $0x44] sm:$0xf]
        %v271 = vld [vmem:[%s1 + $0x48] sm:$0xf]
        %v272 = vld [vmem:[%s1 + $0x4c] sm:$0xf]
        %v273 = vld [vmem:[%s1 + $0x50] sm:$0xf]
        %v274 = vld [vmem:[%s1 + $0x54] sm:$0xf]
        %v275 = vld [vmem:[%s1 + $0x58] sm:$0xf]
        %v276 = vld [vmem:[%s1 + $0x5c] sm:$0xf]
        %v277 = vld [vmem:[%s2] sm:$0x1]
        %v279 = vlaneseq
        %v280 = vshrl.u32 %v279, 7
        %v281 = vsub.s32 0, %v280
        %v282 = vrot.slane %v277, %v281
        %v286 = vunpack.c.l.b16 %v251
        %v287 = vunpack.c.h.b16 %v251
        %v288 = vunpack.c.l.b16 %v252
        %v289 = vunpack.c.h.b16 %v252
        %v290 = vpack.c.b16 %v288, %v286
        %v291 = vpack.c.b16 %v289, %v287
        %v317 = vunpack.c.l.b16 %v253
        %v318 = vunpack.c.l.b16 %v254
        %v319 = vunpack.c.l.b16 %v255
        %v320 = vunpack.c.l.b16 %v256
        %v321 = vunpack.c.l.b16 %v257
        %v322 = vunpack.c.l.b16 %v258
        %v323 = vunpack.c.l.b16 %v259
        %v324 = vunpack.c.l.b16 %v260
        %v325 = vunpack.c.l.b16 %v261
        %v326 = vunpack.c.l.b16 %v262
        %v327 = vunpack.c.l.b16 %v263
        %v328 = vunpack.c.l.b16 %v264
        %v329 = vunpack.c.l.b16 %v265
        %v330 = vunpack.c.l.b16 %v266
        %v331 = vunpack.c.l.b16 %v267
        %v332 = vunpack.c.l.b16 %v268
        %v333 = vunpack.c.l.b16 %v269
        %v334 = vunpack.c.l.b16 %v270
        %v335 = vunpack.c.l.b16 %v271
        %v336 = vunpack.c.l.b16 %v272
        %v337 = vunpack.c.l.b16 %v273
        %v338 = vunpack.c.l.b16 %v274
        %v339 = vunpack.c.l.b16 %v275
        %v340 = vunpack.c.l.b16 %v276
        %v341 = vpack.c.b16 %v318, %v317
        %v342 = vpack.c.b16 %v320, %v319
        %v343 = vpack.c.b16 %v322, %v321
        %v344 = vpack.c.b16 %v324, %v323
        %v345 = vpack.c.b16 %v326, %v325
        %v346 = vpack.c.b16 %v328, %v327
        %v347 = vpack.c.b16 %v330, %v329
        %v348 = vpack.c.b16 %v332, %v331
        %v349 = vpack.c.b16 %v334, %v333
        %v350 = vpack.c.b16 %v336, %v335
        %v351 = vpack.c.b16 %v338, %v337
        %v352 = vpack.c.b16 %v340, %v339
        %vm365 = vcmask 523264
        %v367 = vsel %vm365, %v291, 0
        %369 = vmatprep.subr.bf16.mxu0 0
        %370 = vmatpush1.bf16.msra.mxu0 %v348
        %371 = vmatprep.subr.bf16.mxu0 0
        %372 = vmatpush1.bf16.msra.mxu0 %v347
        %373 = vmatprep.subr.bf16.mxu0 0
        %374 = vmatpush1.bf16.msra.mxu0 %v346
        %375 = vmatprep.subr.bf16.mxu0 0
        %376 = vmatpush1.bf16.msra.mxu0 %v345
        %377 = vmatprep.subr.bf16.mxu0 0
        %378 = vmatpush1.bf16.msra.mxu0 %v344
        %379 = vmatprep.subr.bf16.mxu0 0
        %380 = vmatpush1.bf16.msra.mxu0 %v343
        %381 = vmatprep.subr.bf16.mxu0 0
        %382 = vmatpush1.bf16.msra.mxu0 %v342
        %383 = vmatprep.subr.bf16.mxu0 0
        %384 = vmatpush1.bf16.msra.mxu0 %v341
        %385 = vmatprep.subr.bf16.mxu0 0
        %386 = vmatpush2.bf16.msra.mxu0 0
        %387 = vmatprep.subr.bf16.mxu0 0
        %388 = vmatpush2.bf16.msra.mxu0 0
        %389 = vmatprep.subr.bf16.mxu0 0
        %390 = vmatpush2.bf16.msra.mxu0 0
        %391 = vmatprep.subr.bf16.mxu0 0
        %392 = vmatpush2.bf16.msra.mxu0 0
        %393 = vmatprep.subr.bf16.mxu0 0
        %394 = vmatpush2.bf16.msra.mxu0 %v352
        %395 = vmatprep.subr.bf16.mxu0 0
        %396 = vmatpush2.bf16.msra.mxu0 %v351
        %397 = vmatprep.subr.bf16.mxu0 0
        %398 = vmatpush2.bf16.msra.mxu0 %v350
        %399 = vmatprep.subr.bf16.mxu0 0
        %400 = vmatpush2.bf16.msra.mxu0 %v349
        %401 = vmatprep.mubr.bf16.mxu0 %v367
        %402 = vmatmul.mubr.bf16.gmra.mxu0 %v290
        %v403 = vpop.f32.mrf.mxu0
        %v404 = vadd.f32 %v282, %v403
        %v405 = vpop.f32.mrf.mxu0
        %v406 = vpop.f32.mrf.mxu0
        %v407 = vadd.f32 %v282, %v406
        %v408 = vpop.f32.mrf.mxu0
        %409 = vdwg.mxu0
        %v410 = vmul.f32 %v404, %v404
        %v411 = vmul.f32 %v407, %v407
        %v412 = vmul.f32 %v404, %v410
        %v413 = vmul.f32 %v407, %v411
        %v414 = vmul.f32 %v412, 0.044715
        %v415 = vmul.f32 %v413, 0.044715
        %v416 = vadd.f32 %v404, %v414
        %v417 = vadd.f32 %v407, %v415
        %v418 = vmul.f32 %v416, 0.7978846
        %v419 = vmul.f32 %v417, 0.7978846
        %v420 = vtanh.pop %v418
        %v421 = vtanh.pop %v419
        %v422 = vadd.f32 %v420, 1.0
        %v423 = vadd.f32 %v421, 1.0
        %v424 = vmul.f32 %v422, 0.5
        %v425 = vmul.f32 %v423, 0.5
        %v426 = vmul.f32 %v404, %v424
        %v427 = vmul.f32 %v407, %v425
        %v428 = vld [vmem:[%s3] sm:$0xff]
        %v429 = vld [vmem:[%s3 + $0x8] sm:$0xff]
        %v430 = vld [vmem:[%s4] sm:$0xff]
        %v431 = vld [vmem:[%s4 + $0x8] sm:$0xff]
        %433 = vset.pattern.permute.xlu0 0
        %434 = vperm.xlu0 %433, %v430
        %v435 = vpop.permute.xlu0 %434
        %438 = vset.pattern.permute.xlu0 0
        %439 = vperm.xlu0 %438, %v431
        %v440 = vpop.permute.xlu0 %439
        %vm442 = vcmask 261120
        %v444 = vsel %vm442, %v428, 0
        %v447 = vsel %vm442, %v429, 0
        %v450 = vsel %vm442, %v426, 0
        %v453 = vsel %vm442, %v427, 0
        %455 = vmatprep.subr.mxu0 0.0
        %456 = vmatpush1.xpose.msra.mxu0 0.0
        %457 = vmatprep.subr.mxu0 0.0
        %458 = vmatpush1.xpose.msra.mxu0 0.0
        %459 = vmatprep.subr.mxu0 0.0
        %460 = vmatpush1.xpose.msra.mxu0 0.0
        %461 = vmatprep.subr.mxu0 0.0
        %462 = vmatpush1.xpose.msra.mxu0 0.0
        %463 = vmatprep.subr.mxu0 0.0
        %464 = vmatpush1.xpose.msra.mxu0 0.0
        %465 = vmatprep.subr.mxu0 0.0
        %466 = vmatpush1.xpose.msra.mxu0 0.0
        %467 = vmatprep.subr.mxu0 0.0
        %468 = vmatpush1.xpose.msra.mxu0 0.0
        %469 = vmatprep.subr.mxu0 0.0
        %470 = vmatpush1.xpose.msra.mxu0 0.0
        %471 = vmatprep.subr.mxu0 0.0
        %472 = vmatpush1.xpose.msra.mxu0 0.0
        %473 = vmatprep.subr.mxu0 0.0
        %474 = vmatpush1.xpose.msra.mxu0 0.0
        %475 = vmatprep.subr.mxu0 0.0
        %476 = vmatpush1.xpose.msra.mxu0 0.0
        %477 = vmatprep.subr.mxu0 0.0
        %478 = vmatpush1.xpose.msra.mxu0 0.0
        %479 = vmatprep.subr.mxu0 0.0
        %480 = vmatpush1.xpose.msra.mxu0 0.0
        %481 = vmatprep.subr.mxu0 0.0
        %482 = vmatpush1.xpose.msra.mxu0 0.0
        %483 = vmatprep.subr.mxu0 0.0
        %484 = vmatpush1.xpose.msra.mxu0 %v453
        %485 = vmatprep.subr.mxu0 0.0
        %486 = vmatpush1.xpose.msra.mxu0 %v450
        %487 = vmatprep.subr.mxu0 0.0
        %488 = vmatpush2.xpose.msra.mxu0 0.0
        %489 = vmatprep.subr.mxu0 0.0
        %490 = vmatpush2.xpose.msra.mxu0 0.0
        %491 = vmatprep.subr.mxu0 0.0
        %492 = vmatpush2.xpose.msra.mxu0 0.0
        %493 = vmatprep.subr.mxu0 0.0
        %494 = vmatpush2.xpose.msra.mxu0 0.0
        %495 = vmatprep.subr.mxu0 0.0
        %496 = vmatpush2.xpose.msra.mxu0 0.0
        %497 = vmatprep.subr.mxu0 0.0
        %498 = vmatpush2.xpose.msra.mxu0 0.0
        %499 = vmatprep.subr.mxu0 0.0
        %500 = vmatpush2.xpose.msra.mxu0 0.0
        %501 = vmatprep.subr.mxu0 0.0
        %502 = vmatpush2.xpose.msra.mxu0 0.0
        %503 = vmatprep.subr.mxu0 0.0
        %504 = vmatpush2.xpose.msra.mxu0 0.0
        %505 = vmatprep.subr.mxu0 0.0
        %506 = vmatpush2.xpose.msra.mxu0 0.0
        %507 = vmatprep.subr.mxu0 0.0
        %508 = vmatpush2.xpose.msra.mxu0 0.0
        %509 = vmatprep.subr.mxu0 0.0
        %510 = vmatpush2.xpose.msra.mxu0 0.0
        %511 = vmatprep.subr.mxu0 0.0
        %512 = vmatpush2.xpose.msra.mxu0 0.0
        %513 = vmatprep.subr.mxu0 0.0
        %514 = vmatpush2.xpose.msra.mxu0 0.0
        %515 = vmatprep.subr.mxu0 0.0
        %516 = vmatpush2.xpose.msra.mxu0 0.0
        %517 = vmatprep.subr.mxu0 0.0
        %518 = vmatpush2.xpose.msra.mxu0 0.0
        %519 = vmatprep.mubr.f32.mxu0 0.0
        %520 = vmatmul.mubr.f32.gmra.mxu0 %v444
        %v521 = vpop.f32.mrf.mxu0
        %v522 = vadd.f32 %v435, %v521
        %v523 = vpop.f32.mrf.mxu0
        %524 = vmatprep.mubr.f32.mxu0 0.0
        %525 = vmatmul.mubr.f32.gmra.mxu0 %v447
        %v526 = vpop.f32.mrf.mxu0
        %v527 = vadd.f32 %v440, %v526
        %v528 = vpop.f32.mrf.mxu0
        %529 = vdwg.mxu0
        %v530 = vld [vmem:[%s5] sm:$0xff]
        %v531 = vld [vmem:[%s5 + $0x8] sm:$0xff]
        %v532 = vld [vmem:[%s5 + $0x10] sm:$0xff]
        %v533 = vld [vmem:[%s5 + $0x18] sm:$0xff]
        %vm534 = vcmask 130048
        %v536 = vsel %vm534, %v522, 0
        %v539 = vsel %vm534, %v527, 0
        %541 = vmatprep.subr.mxu0 0.0
        %542 = vmatpush1.msra.mxu0 0.0
        %543 = vmatprep.subr.mxu0 0.0
        %544 = vmatpush1.msra.mxu0 0.0
        %545 = vmatprep.subr.mxu0 0.0
        %546 = vmatpush1.msra.mxu0 0.0
        %547 = vmatprep.subr.mxu0 0.0
        %548 = vmatpush1.msra.mxu0 0.0
        %549 = vmatprep.subr.mxu0 0.0
        %550 = vmatpush1.msra.mxu0 0.0
        %551 = vmatprep.subr.mxu0 0.0
        %552 = vmatpush1.msra.mxu0 0.0
        %553 = vmatprep.subr.mxu0 0.0
        %554 = vmatpush1.msra.mxu0 0.0
        %555 = vmatprep.subr.mxu0 0.0
        %556 = vmatpush1.msra.mxu0 0.0
        %557 = vmatprep.subr.mxu0 0.0
        %558 = vmatpush1.msra.mxu0 0.0
        %559 = vmatprep.subr.mxu0 0.0
        %560 = vmatpush1.msra.mxu0 0.0
        %561 = vmatprep.subr.mxu0 0.0
        %562 = vmatpush1.msra.mxu0 0.0
        %563 = vmatprep.subr.mxu0 0.0
        %564 = vmatpush1.msra.mxu0 0.0
        %565 = vmatprep.subr.mxu0 0.0
        %566 = vmatpush1.msra.mxu0 0.0
        %567 = vmatprep.subr.mxu0 0.0
        %568 = vmatpush1.msra.mxu0 0.0
        %569 = vmatprep.subr.mxu0 %v533
        %570 = vmatpush1.msra.mxu0 %v532
        %571 = vmatprep.subr.mxu0 %v531
        %572 = vmatpush1.msra.mxu0 %v530
        %573 = vmatprep.subr.mxu0 0.0
        %574 = vmatpush2.msra.mxu0 0.0
        %575 = vmatprep.subr.mxu0 0.0
        %576 = vmatpush2.msra.mxu0 0.0
        %577 = vmatprep.subr.mxu0 0.0
        %578 = vmatpush2.msra.mxu0 0.0
        %579 = vmatprep.subr.mxu0 0.0
        %580 = vmatpush2.msra.mxu0 0.0
        %581 = vmatprep.subr.mxu0 0.0
        %582 = vmatpush2.msra.mxu0 0.0
        %583 = vmatprep.subr.mxu0 0.0
        %584 = vmatpush2.msra.mxu0 0.0
        %585 = vmatprep.subr.mxu0 0.0
        %586 = vmatpush2.msra.mxu0 0.0
        %587 = vmatprep.subr.mxu0 0.0
        %588 = vmatpush2.msra.mxu0 0.0
        %589 = vmatprep.subr.mxu0 0.0
        %590 = vmatpush2.msra.mxu0 0.0
        %591 = vmatprep.subr.mxu0 0.0
        %592 = vmatpush2.msra.mxu0 0.0
        %593 = vmatprep.subr.mxu0 0.0
        %594 = vmatpush2.msra.mxu0 0.0
        %595 = vmatprep.subr.mxu0 0.0
        %596 = vmatpush2.msra.mxu0 0.0
        %597 = vmatprep.subr.mxu0 0.0
        %598 = vmatpush2.msra.mxu0 0.0
        %599 = vmatprep.subr.mxu0 0.0
        %600 = vmatpush2.msra.mxu0 0.0
        %601 = vmatprep.subr.mxu0 0.0
        %602 = vmatpush2.msra.mxu0 0.0
        %603 = vmatprep.subr.mxu0 0.0
        %604 = vmatpush2.msra.mxu0 0.0
        %605 = vmatprep.mubr.f32.mxu0 0.0
        %606 = vmatmul.mubr.f32.gmra.mxu0 %v536
        %v607 = vpop.f32.mrf.mxu0
        %v608 = vadd.f32 0.0, %v607
        %v609 = vpop.f32.mrf.mxu0
        %v610 = vadd.f32 0.0, %v609
        %611 = vmatprep.mubr.f32.mxu0 0.0
        %612 = vmatmul.mubr.f32.gmra.mxu0 %v539
        %v613 = vpop.f32.mrf.mxu0
        %v614 = vadd.f32 0.0, %v613
        %v615 = vpop.f32.mrf.mxu0
        %v616 = vadd.f32 0.0, %v615
        %617 = vdwg.mxu0
        %618 = vst [vmem:[%s244] sm:$0xff] %v608
        %619 = vst [vmem:[%s244 + $0x8] sm:$0xff] %v610
        %620 = vst [vmem:[%s244 + $0x10] sm:$0xff] %v614
        %621 = vst [vmem:[%s244 + $0x18] sm:$0xff] %v616
        %s622 = sand.u32 %s159, 1
        %s623 = scalar_lea.sflag [#allocation3], %s622
        %s624 = sand.u32 %s159, 1
        %s625 = smul.addr %s624, 32
        %s626 = scalar_lea.vmem [#allocation2], %s625
        // Predicated region
        $region45: #{tpu_custom_call.1} parent=43 // pred_check
          %p627 = pneg %p169
        $region46: #{tpu_custom_call.1} parent=43 // pred_check_branch
          %629 = sbr.rel (%p627) target = $region48
        $region47: #{tpu_custom_call.1} parent=43 // pred_region
          %s631 = ssub.s32 512, 512
          %632 = vsyncadd %s623, %s631
          %s633 = smul.addr %s20, 4
          %s634 = smul.addr %s633, 128
          %s635 = scalar_lea.hbm %s6, %s634
          %s636 = sshll.u32 %s626, 4
          %s637 = int_to_ptr.vmem [resolvable:$true] %s636
          %642 = dma.vmem_to_hbm [thread:$0]  %s637, 512, %s635, %s623, 256, 256, 16
        $region48: #{tpu_custom_call.1} parent=43 // pred_fallthru
          _
      $region44: #{tpu_custom_call.1} parent=5 // pred_fallthru
        _
      %p643 = scmp.le.s32.totalorder 2, %s15
      // Predicated region
      $region49: #{tpu_custom_call.1} parent=5 // pred_check
        %p644 = pneg %p643
      $region50: #{tpu_custom_call.1} parent=5 // pred_check_branch
        %646 = sbr.rel (%p644) target = $region52
      $region51: #{tpu_custom_call.1} parent=5 // pred_region
        %s647 = ssub.s32 %s15, 2
        // Predicated region
        $region53: #{tpu_custom_call.1} parent=51 // pred_check
          %p648 = pneg %p175
        $region54: #{tpu_custom_call.1} parent=51 // pred_check_branch
          %650 = sbr.rel (%p648) target = $region56
        $region55: #{tpu_custom_call.1} parent=51 // pred_region
          %s651 = sand.u32 %s160, 1
          %s652 = scalar_lea.sflag [#allocation3], %s651
          %s653 = sand.u32 %s160, 1
          %s654 = smul.addr %s653, 32
          %s655 = scalar_lea.vmem [#allocation2], %s654
          %656 = dma.done %s652, 512
        $region56: #{tpu_custom_call.1} parent=51 // pred_fallthru
          _
      $region52: #{tpu_custom_call.1} parent=5 // pred_fallthru
        _
    $region6: #{tpu_custom_call.1} parent=1 // loop_footer
      %s19 = sadd.s32 1, %s15
    $region7: #{tpu_custom_call.1} parent=1 // loop_footer_branch
      %14 = sbr.rel target = $region3
    $region8: #{tpu_custom_call.1} parent=1 // loop_exit
      _
    %657 = vsyncpa [#allocation3], 1
    %s658 = scalar_lea.sflag [#allocation3], 1
    %659 = vsyncpa %s658, 1

</llo_original>
